<compile_context>
chip_gen: v7x
topology: tpu7x:2x2x1
jax: 0.10.0
libtpu: 0.0.40
codegen_flags: <defaults>
</compile_context>

<pallas_src>
import jax
import jax.numpy as jnp
from jax.experimental import pallas as pl
from jax.experimental.pallas import tpu as pltpu

_LANES = 128      # TPU lane width (last dim of a vreg)
_SUBLANES = 8     # TPU sublane count (second-to-last dim of a vreg)


def _cdiv(a, b):
    return -(-a // b)


def _round_up(a, b):
    return _cdiv(a, b) * b


def _assert_shape_equal(outputs, labels):
    assert outputs.ndim == labels.ndim, (
        f"outputs and labels must have the same dimensions, got: "
        f"outputs.ndim={outputs.ndim!r}, labels.ndim={labels.ndim!r}"
    )
    assert outputs.shape == labels.shape, (
        f"outputs and labels must have the same shape, got: "
        f"outputs.shape={outputs.shape!r}, labels.shape={labels.shape!r}"
    )


def _tpu_hw_params():
    """Return (vmem_capacity_bytes, num_tensorcores) with safe fallbacks."""
    vmem_cap = 64 << 20     # conservative fallback (v7x physical VMEM)
    n_tc = 1
    try:
        vmem_cap = int(pltpu.get_tpu_info().vmem_capacity_bytes)
    except Exception:
        pass
    try:
        kind = jax.devices()[0].device_kind.lower()
        if "v7" in kind:     # v7x: 2 TensorCores per chip share HBM bandwidth
            n_tc = 2
    except Exception:
        pass
    return vmem_cap, n_tc


def _make_loss_kernel(weighted: bool, rows: int, row_tile: int, apply_mask: bool):
    """Kernel factory: weighted -> 3 input streams, unweighted -> 2 streams."""

    def kernel(*refs):
        if weighted:
            o_ref, l_ref, v_ref, part_ref = refs
        else:
            o_ref, l_ref, part_ref = refs

        p = pl.program_id(0)   # "parallel" axis (TensorCore split on v7x)
        j = pl.program_id(1)   # reduction ("arbitrary") axis

        # Output block is resident across the reduction axis -> accumulator.
        @pl.when(j == 0)
        def _():
            part_ref[...] = jnp.zeros_like(part_ref)

        d = o_ref[...].astype(jnp.float32) - l_ref[...].astype(jnp.float32)
        sq = d * d
        if weighted:
            sq = v_ref[...].astype(jnp.float32) * sq

        if apply_mask:
            # Ragged last block: rows past `rows` are unspecified (may be
            # NaN/Inf) -> select them away before accumulation.
            n_steps = pl.num_programs(1)
            row_start = (p * n_steps + j) * row_tile
            row_idx = row_start + jax.lax.broadcasted_iota(
                jnp.int32, (row_tile, 1), 0)
            sq = jnp.where(row_idx < rows, sq, 0.0)

        # Fold the (row_tile, 128) tile onto one vreg-shaped (8, 128) partial
        # with sublane/lane-aligned VPU adds; the true cross-lane reduce is
        # deferred to the wrapper and runs exactly once.
        part_ref[...] += jnp.sum(sq.reshape(-1, _SUBLANES, _LANES), axis=0)

    return kernel


def allocation_loss(outputs, labels, valuations=None, *,
                    n_par=None, target_block_bytes=None):
    """Valuation-weighted MSE allocation loss as a Pallas TPU kernel.

    outputs, labels (and optionally valuations) are arrays of identical shape.
    Data is flattened, laid out 128-wide on the lane axis (padded by < 128
    zeros only when total % 128 != 0), and the ragged tail of the last row
    block is masked inside the kernel.  Returns a float32 scalar; the mean
    denominator always uses the true element count.
    """
    _assert_shape_equal(outputs, labels)
    weighted = valuations is not None
    if weighted:
        _assert_shape_equal(outputs, valuations)

    total = int(outputs.size)
    flat = [outputs.reshape(-1), labels.reshape(-1)]
    if weighted:
        flat.append(valuations.reshape(-1))

    # Lane padding only (<= 127 zeros), only when needed; the zero pad sits in
    # an in-bounds row so diff == 0 and it contributes nothing to the sum.
    lane_pad = (-total) % _LANES
    if lane_pad:
        flat = [jnp.pad(a, (0, lane_pad)) for a in flat]
    rows = (total + lane_pad) // _LANES
    arrs2d = [a.reshape(rows, _LANES) for a in flat]

    # ---- generation-aware knobs --------------------------------------------
    vmem_cap, n_tc = _tpu_hw_params()
    if n_par is None:
        n_par = n_tc
    if rows < 256:           # tiny input: splitting across cores is pure overhead
        n_par = 1

    max_itemsize = max(a.dtype.itemsize for a in arrs2d)
    if target_block_bytes is None:
        # ~8 MiB/stream on 128-MiB-VMEM chips (v5e/v6e), ~4 MiB/stream on v7x.
        target_block_bytes = (8 << 20) if vmem_cap >= (100 << 20) else (4 << 20)
    row_tile_target = max(
        _SUBLANES,
        (target_block_bytes // (_LANES * max_itemsize)) // _SUBLANES * _SUBLANES,
    )

    # VMEM budget: double-buffered input blocks + ~4 f32 in-kernel temporaries.
    budget = max(vmem_cap - (16 << 20), 24 << 20)
    bytes_per_row = (sum(2 * _LANES * a.dtype.itemsize for a in arrs2d)
                     + 4 * _LANES * 4)
    row_tile_vmem = max(_SUBLANES,
                        (budget // bytes_per_row) // _SUBLANES * _SUBLANES)

    rows_per_core = _cdiv(rows, n_par)
    row_tile = max(_SUBLANES,
                   min(row_tile_target, row_tile_vmem,
                       _round_up(rows_per_core, _SUBLANES)))
    n_steps = _cdiv(rows_per_core, row_tile)
    apply_mask = (n_par * n_steps * row_tile) != rows

    in_spec = pl.BlockSpec((row_tile, _LANES), lambda p, j: (p * n_steps + j, 0))
    out_spec = pl.BlockSpec((_SUBLANES, _LANES), lambda p, j: (p, 0))

    in_bytes = sum(2 * row_tile * _LANES * a.dtype.itemsize for a in arrs2d)
    temp_bytes = 4 * row_tile * _LANES * 4
    out_bytes = 2 * n_par * _SUBLANES * _LANES * 4
    vmem_limit = int(min(max(in_bytes + temp_bytes + out_bytes + (2 << 20),
                             16 << 20),
                         vmem_cap - (12 << 20)))

    flops = (4 if weighted else 3) * total
    bytes_accessed = sum(int(a.nbytes) for a in arrs2d) + out_bytes // 2
    cost = pl.CostEstimate(flops=flops, transcendentals=0,
                           bytes_accessed=bytes_accessed)

    partials = pl.pallas_call(
        _make_loss_kernel(weighted, rows, row_tile, apply_mask),
        out_shape=jax.ShapeDtypeStruct((n_par * _SUBLANES, _LANES), jnp.float32),
        grid_spec=pltpu.PrefetchScalarGridSpec(
            num_scalar_prefetch=0,
            grid=(n_par, n_steps),
            in_specs=[in_spec] * len(arrs2d),
            out_specs=out_spec,
        ),
        compiler_params=pltpu.CompilerParams(
            dimension_semantics=("parallel", "arbitrary"),
            vmem_limit_bytes=vmem_limit,
        ),
        cost_estimate=cost,
    )(*arrs2d)

    # Single tiny cross-lane reduce + divide (true element count, not padded).
    # NOTE: f32 accumulation; for >~1e8 elements expect mean-of-squares error
    # beyond 1e-5 rtol vs a float64 reference.
    return jnp.sum(partials) / jnp.float32(total)


if __name__ == "__main__":
    key = jax.random.PRNGKey(0)
    k1, k2, k3 = jax.random.split(key, 3)

    # Small shapes; total = 768 (rows=6, not a multiple of 8) exercises the
    # ragged-row-block mask path without any wrapper-side padding.
    batch, agents, items = 2, 4, 96
    outputs = jax.random.uniform(k1, (batch, agents, items), dtype=jnp.float32)
    labels = jax.random.uniform(k2, (batch, agents, items), dtype=jnp.float32)
    valuations = jax.random.uniform(k3, (batch, agents, items), dtype=jnp.float32)

    # Weighted path (3 input streams).
    loss_w = jax.block_until_ready(allocation_loss(outputs, labels, valuations))
    ref_w = jnp.mean(valuations * (outputs - labels) ** 2)
    assert jnp.allclose(loss_w, ref_w, rtol=1e-5, atol=1e-6), (loss_w, ref_w)

    # Unweighted fast path (2 input streams).
    loss_u = jax.block_until_ready(allocation_loss(outputs, labels))
    ref_u = jnp.mean((outputs - labels) ** 2)
    assert jnp.allclose(loss_u, ref_u, rtol=1e-5, atol=1e-6), (loss_u, ref_u)

    # bf16 inputs (halved HBM bytes; kernel accumulates in f32).
    o_bf = outputs.astype(jnp.bfloat16)
    l_bf = labels.astype(jnp.bfloat16)
    v_bf = valuations.astype(jnp.bfloat16)
    loss_b = jax.block_until_ready(allocation_loss(o_bf, l_bf, v_bf))
    ref_b = jnp.mean(v_bf.astype(jnp.float32)
                     * (o_bf.astype(jnp.float32) - l_bf.astype(jnp.float32)) ** 2)
    assert jnp.allclose(loss_b, ref_b, rtol=1e-4, atol=1e-6), (loss_b, ref_b)

    # total not a multiple of 128 -> exercises the <=127-element lane pad + mask.
    k4, k5, k6 = jax.random.split(jax.random.PRNGKey(1), 3)
    o2 = jax.random.uniform(k4, (3, 5, 17), dtype=jnp.float32)
    l2 = jax.random.uniform(k5, (3, 5, 17), dtype=jnp.float32)
    v2 = jax.random.uniform(k6, (3, 5, 17), dtype=jnp.float32)
    loss_r = jax.block_until_ready(allocation_loss(o2, l2, v2))
    ref_r = jnp.mean(v2 * (o2 - l2) ** 2)
    assert jnp.allclose(loss_r, ref_r, rtol=1e-5, atol=1e-6), (loss_r, ref_r)

    print("KERNEL_OK")
</pallas_src>

<mosaic_0001>
module attributes {stable_mosaic.version = 11 : i64} {
  func.func @kernel(%arg0: i32, %arg1: i32, %arg2: memref<8x128xf32, #tpu.memory_space<vmem>>, %arg3: memref<8x128xf32, #tpu.memory_space<vmem>>, %arg4: memref<8x128xf32, #tpu.memory_space<vmem>>, %arg5: memref<8x128xf32, #tpu.memory_space<vmem>>) attributes {dimension_semantics = [#tpu.dimension_semantics<parallel>, #tpu.dimension_semantics<arbitrary>], iteration_bounds = array<i64: 1, 1>, scalar_prefetch = 0 : i64, scratch_operands = 0 : i64, tpu.core_type = #tpu.core_type<tc>, window_params = [{transform_indices = @transform_0, window_bounds = array<i64: 8, 128>}, {transform_indices = @transform_1, window_bounds = array<i64: 8, 128>}, {transform_indices = @transform_2, window_bounds = array<i64: 8, 128>}, {transform_indices = @transform_3, window_bounds = array<i64: 8, 128>}]} {
    %c0_i32 = arith.constant 0 : i32
    %0 = arith.cmpi eq, %arg1, %c0_i32 : i32
    %1 = arith.extui %0 : i1 to i32
    %c0_i32_0 = arith.constant 0 : i32
    %2 = arith.cmpi ne, %1, %c0_i32_0 : i32
    scf.if %2 {
      %cst_11 = arith.constant 0.000000e+00 : f32
      %26 = vector.broadcast %cst_11 : f32 to vector<8x128xf32>
      %c0_12 = arith.constant 0 : index
      %c0_13 = arith.constant 0 : index
      %27 = vector.load %arg5[%c0_12, %c0_13] : memref<8x128xf32, #tpu.memory_space<vmem>>, vector<8x128xf32>
      tpu.vector_store %arg5[%c0_12, %c0_13], %26 {strides = array<i32>} : memref<8x128xf32, #tpu.memory_space<vmem>>, vector<8x128xf32>,
    } else {
    }
    %c0 = arith.constant 0 : index
    %c0_1 = arith.constant 0 : index
    %3 = vector.load %arg2[%c0, %c0_1] : memref<8x128xf32, #tpu.memory_space<vmem>>, vector<8x128xf32>
    %c0_2 = arith.constant 0 : index
    %c0_3 = arith.constant 0 : index
    %4 = vector.load %arg3[%c0_2, %c0_3] : memref<8x128xf32, #tpu.memory_space<vmem>>, vector<8x128xf32>
    %5 = arith.subf %3, %4 : vector<8x128xf32>
    %6 = arith.mulf %5, %5 : vector<8x128xf32>
    %c0_4 = arith.constant 0 : index
    %c0_5 = arith.constant 0 : index
    %7 = vector.load %arg4[%c0_4, %c0_5] : memref<8x128xf32, #tpu.memory_space<vmem>>, vector<8x128xf32>
    %8 = arith.mulf %7, %6 : vector<8x128xf32>
    %c1_i32 = arith.constant 1 : i32
    %9 = arith.muli %arg0, %c1_i32 : i32
    %10 = arith.addi %9, %arg1 : i32
    %c8_i32 = arith.constant 8 : i32
    %11 = arith.muli %10, %c8_i32 : i32
    %12 = tpu.iota {dimensions = array<i32: 0>} : vector<8x1xi32>
    %13 = vector.broadcast %11 : i32 to vector<8x1xi32>
    %14 = arith.addi %13, %12 : vector<8x1xi32>
    %c6_i32 = arith.constant 6 : i32
    %15 = vector.broadcast %c6_i32 : i32 to vector<8x1xi32>
    %16 = arith.cmpi slt, %14, %15 : vector<8x1xi32>
    %cst = arith.constant 0.000000e+00 : f32
    %17 = vector.shape_cast %16 : vector<8x1xi1> to vector<8x1xi1>
    %18 = vector.broadcast %17 : vector<8x1xi1> to vector<8x128xi1>
    %19 = vector.broadcast %cst : f32 to vector<8x128xf32>
    %20 = arith.select %18, %8, %19 : vector<8x128xi1>, vector<8x128xf32>
    %c0_6 = arith.constant 0 : index
    %c0_7 = arith.constant 0 : index
    %21 = vector.load %arg5[%c0_6, %c0_7] : memref<8x128xf32, #tpu.memory_space<vmem>>, vector<8x128xf32>
    %22 = vector.shape_cast %20 : vector<8x128xf32> to vector<1x8x128xf32>
    %cst_8 = arith.constant dense<0.000000e+00> : vector<8x128xf32>
    %23 = vector.multi_reduction <add>, %22, %cst_8 [0] : vector<1x8x128xf32> to vector<8x128xf32>
    %24 = arith.addf %21, %23 : vector<8x128xf32>
    %c0_9 = arith.constant 0 : index
    %c0_10 = arith.constant 0 : index
    %25 = vector.load %arg5[%c0_9, %c0_10] : memref<8x128xf32, #tpu.memory_space<vmem>>, vector<8x128xf32>
    tpu.vector_store %arg5[%c0_9, %c0_10], %24 {strides = array<i32>} : memref<8x128xf32, #tpu.memory_space<vmem>>, vector<8x128xf32>,
    return
  }
  func.func @transform_0(%arg0: i32, %arg1: i32) -> (i32, i32) {
    %c1_i32 = arith.constant 1 : i32
    %0 = arith.muli %arg0, %c1_i32 : i32
    %1 = arith.addi %0, %arg1 : i32
    %c0_i32 = arith.constant 0 : i32
    %c0_i32_0 = arith.constant 0 : i32
    return %1, %c0_i32 : i32, i32
  }
  func.func @transform_1(%arg0: i32, %arg1: i32) -> (i32, i32) {
    %c1_i32 = arith.constant 1 : i32
    %0 = arith.muli %arg0, %c1_i32 : i32
    %1 = arith.addi %0, %arg1 : i32
    %c0_i32 = arith.constant 0 : i32
    %c0_i32_0 = arith.constant 0 : i32
    return %1, %c0_i32 : i32, i32
  }
  func.func @transform_2(%arg0: i32, %arg1: i32) -> (i32, i32) {
    %c1_i32 = arith.constant 1 : i32
    %0 = arith.muli %arg0, %c1_i32 : i32
    %1 = arith.addi %0, %arg1 : i32
    %c0_i32 = arith.constant 0 : i32
    %c0_i32_0 = arith.constant 0 : i32
    return %1, %c0_i32 : i32, i32
  }
  func.func @transform_3(%arg0: i32, %arg1: i32) -> (i32, i32) {
    %c0_i32 = arith.constant 0 : i32
    %c0_i32_0 = arith.constant 0 : i32
    return %arg0, %c0_i32 : i32, i32
  }
}

</mosaic_0001>

<llo_original>
// kernel: tpu_custom_call.1
$region0: #{tpu_custom_call.1}
  #allocation0 [shape = 'u32[]', space=smem, size = 0x4, offset = 0x4, fixed_abs, tag = 'smem constant byte address 0x4 - core index']
  #allocation1 [shape = 'u32[144,128]{1,0:T(1,128)}', space=vmem, size = 0x12000, scoped, tag = 'internal scratch']
  %s0 = inlined_call_operand.hbm [shape: f32[6,128], index: 0, kind: input, shape index: {}]
  %s1 = inlined_call_operand.hbm [shape: f32[6,128], index: 1, kind: input, shape index: {}]
  %s2 = inlined_call_operand.hbm [shape: f32[6,128], index: 2, kind: input, shape index: {}]
  %s3 = inlined_call_operand.hbm [shape: f32[8,128], index: 3, kind: output, shape index: {}]
  %s4 = sld [smem:[#allocation0]]
  $region38: #{tpu_custom_call.1} parent=0
    _
  %s6 = ssub.s32 1, %s4
  %s7 = scalar_select 0, %s6, %s4
  $region1: #{tpu_custom_call.1} parent=0
    #allocation2 [shape = 'u8[4096]{0}', space=vmem, size = 0x1000, scoped, tag = 'input window, operand 0, single buffered']
    #allocation3 [shape = 's32[1]{0}', space=sflag, size = 0x4, scoped, tag = 'scoped memory for tpu_custom_call.1']
    #allocation4 [shape = 's32[1]{0}', space=sflag, size = 0x4, scoped, tag = 'scoped memory for tpu_custom_call.1']
    #allocation5 [shape = 'u8[4096]{0}', space=vmem, size = 0x1000, scoped, tag = 'input window, operand 1, single buffered']
    #allocation6 [shape = 's32[1]{0}', space=sflag, size = 0x4, scoped, tag = 'scoped memory for tpu_custom_call.1']
    #allocation7 [shape = 'u8[4096]{0}', space=vmem, size = 0x1000, scoped, tag = 'input window, operand 2, single buffered']
    #allocation8 [shape = 'u8[4096]{0}', space=vmem, size = 0x1000, scoped, tag = 'output window, operand 0, single buffered']
    %8 = vsyncpa [#allocation3], 0
    %9 = vsyncpa [#allocation6], 0
    %10 = vsyncpa [#allocation4], 0
    // Predicated region
    $region2: #{tpu_custom_call.1} parent=1 // pred_check
      _
    $region3: #{tpu_custom_call.1} parent=1 // pred_check_branch
      %12 = sbr.rel (0) target = $region5
    $region4: #{tpu_custom_call.1} parent=1 // pred_region
      %s13 = sadd.s32 0, 0
      %s15 = ssub.s32 128, 128
      %16 = vsyncadd [#allocation3], %s15
      %s17 = smul.addr %s13, 128
      %s18 = scalar_lea.hbm %s0, %s17
      %s20 = sshll.u32 [#allocation2], 4
      %s21 = int_to_ptr.vmem [resolvable:$true] %s20
      %23 = dma.hbm_to_vmem [thread:$0]  %s18, 128, %s21, [#allocation3]
    $region5: #{tpu_custom_call.1} parent=1 // pred_fallthru
      _
    // Predicated region
    $region6: #{tpu_custom_call.1} parent=1 // pred_check
      _
    $region7: #{tpu_custom_call.1} parent=1 // pred_check_branch
      %25 = sbr.rel (0) target = $region9
    $region8: #{tpu_custom_call.1} parent=1 // pred_region
      %s26 = sadd.s32 0, 0
      %s28 = ssub.s32 128, 128
      %29 = vsyncadd [#allocation6], %s28
      %s30 = smul.addr %s26, 128
      %s31 = scalar_lea.hbm %s1, %s30
      %s33 = sshll.u32 [#allocation5], 4
      %s34 = int_to_ptr.vmem [resolvable:$true] %s33
      %36 = dma.hbm_to_vmem [thread:$0]  %s31, 128, %s34, [#allocation6]
    $region9: #{tpu_custom_call.1} parent=1 // pred_fallthru
      _
    // Predicated region
    $region10: #{tpu_custom_call.1} parent=1 // pred_check
      _
    $region11: #{tpu_custom_call.1} parent=1 // pred_check_branch
      %38 = sbr.rel (0) target = $region13
    $region12: #{tpu_custom_call.1} parent=1 // pred_region
      %s39 = sadd.s32 0, 0
      %s41 = ssub.s32 128, 128
      %42 = vsyncadd [#allocation6], %s41
      %s43 = smul.addr %s39, 128
      %s44 = scalar_lea.hbm %s2, %s43
      %s46 = sshll.u32 [#allocation7], 4
      %s47 = int_to_ptr.vmem [resolvable:$true] %s46
      %49 = dma.hbm_to_vmem [thread:$0]  %s44, 128, %s47, [#allocation6]
    $region13: #{tpu_custom_call.1} parent=1 // pred_fallthru
      _
    // Predicated region
    $region14: #{tpu_custom_call.1} parent=1 // pred_check
      _
    $region15: #{tpu_custom_call.1} parent=1 // pred_check_branch
      %51 = sbr.rel (0) target = $region17
    $region16: #{tpu_custom_call.1} parent=1 // pred_region
      %52 = dma.done [#allocation3], 128
    $region17: #{tpu_custom_call.1} parent=1 // pred_fallthru
      _
    // Predicated region
    $region18: #{tpu_custom_call.1} parent=1 // pred_check
      _
    $region19: #{tpu_custom_call.1} parent=1 // pred_check_branch
      %54 = sbr.rel (0) target = $region21
    $region20: #{tpu_custom_call.1} parent=1 // pred_region
      %55 = dma.done [#allocation6], 128
    $region21: #{tpu_custom_call.1} parent=1 // pred_fallthru
      _
    // Predicated region
    $region22: #{tpu_custom_call.1} parent=1 // pred_check
      _
    $region23: #{tpu_custom_call.1} parent=1 // pred_check_branch
      %57 = sbr.rel (0) target = $region25
    $region24: #{tpu_custom_call.1} parent=1 // pred_region
      %58 = dma.done [#allocation6], 128
    $region25: #{tpu_custom_call.1} parent=1 // pred_fallthru
      _
    %s59 = sadd.s32 0, 0
    %s60 = sadd.s32 0, 0
    %s61 = sadd.s32 0, 0
    %p62 = scmp.eq.s32.totalorder 0, 0
    // Predicated region
    $region26: #{tpu_custom_call.1} parent=1 // pred_check
      %p63 = pneg %p62
    $region27: #{tpu_custom_call.1} parent=1 // pred_check_branch
      %65 = sbr.rel (%p63) target = $region29
    $region28: #{tpu_custom_call.1} parent=1 // pred_region
      %66 = vst [vmem:[#allocation8] sm:$0xff] 0.0
    $region29: #{tpu_custom_call.1} parent=1 // pred_fallthru
      _
    %v67 = vld [vmem:[#allocation2] sm:$0xff]
    %v68 = vld [vmem:[#allocation5] sm:$0xff]
    %v69 = vsub.f32 %v67, %v68
    %v70 = vmul.f32 %v69, %v69
    %v71 = vld [vmem:[#allocation7] sm:$0xff]
    %v72 = vmul.f32 %v71, %v70
    %s73 = sadd.s32 0, 0
    %s74 = smul.u32 %s73, 8
    %v75 = vlaneseq
    %v76 = vshrl.u32 %v75, 7
    %v77 = vstv %s74
    %v78 = vadd.s32 %v77, %v76
    %vm79 = vcmp.lt.s32.totalorder %v78, 6
    %v80 = vsel %vm79, 1, 0
    %vm81 = vcmp.eq.s32.totalorder %v80, 1
    %v82 = vsel %vm81, %v72, 0.0
    %v83 = vld [vmem:[#allocation8] sm:$0xff]
    %v84 = vadd.f32 %v82, 0.0
    %v85 = vadd.f32 %v83, %v84
    %86 = vst [vmem:[#allocation8] sm:$0xff] %v85
    // Predicated region
    $region30: #{tpu_custom_call.1} parent=1 // pred_check
      _
    $region31: #{tpu_custom_call.1} parent=1 // pred_check_branch
      %88 = sbr.rel (0) target = $region33
    $region32: #{tpu_custom_call.1} parent=1 // pred_region
      %s90 = ssub.s32 128, 128
      %91 = vsyncadd [#allocation4], %s90
      %s93 = sshll.u32 [#allocation8], 4
      %s94 = int_to_ptr.vmem [resolvable:$true] %s93
      %96 = dma.vmem_to_hbm [thread:$0]  %s94, 128, %s3, [#allocation4]
    $region33: #{tpu_custom_call.1} parent=1 // pred_fallthru
      _
    // Predicated region
    $region34: #{tpu_custom_call.1} parent=1 // pred_check
      _
    $region35: #{tpu_custom_call.1} parent=1 // pred_check_branch
      %98 = sbr.rel (0) target = $region37
    $region36: #{tpu_custom_call.1} parent=1 // pred_region
      %99 = dma.done [#allocation4], 128
    $region37: #{tpu_custom_call.1} parent=1 // pred_fallthru
      _
    %100 = vsyncpa [#allocation3], 1
    %101 = vsyncpa [#allocation6], 1
    %102 = vsyncpa [#allocation4], 1

</llo_original>
